<compile_context>
chip_gen: v6e
topology: v6e:2x2x1
jax: 0.10.0
libtpu: 0.0.40
codegen_flags: <defaults>
</compile_context>

<pallas_src>
import jax
import jax.numpy as jnp
from jax.experimental import pallas as pl
from jax.experimental.pallas import tpu as pltpu

LANES = 128
MIB = 1024 * 1024


def _round_up(x, m):
    return ((x + m - 1) // m) * m


def _vmem_capacity_bytes():
    # Per-generation physical VMEM (v5e/v6e: 128 MiB, v7x: 64 MiB).  Fall back
    # to the most conservative figure (v7x) if the query is unavailable.
    try:
        info = pltpu.get_tpu_info()
        cap = int(getattr(info, "vmem_capacity_bytes", 0))
        if cap > 0:
            return cap
    except Exception:
        pass
    return 64 * MIB


def _pick_tile_c(C, cap_c):
    """Largest multiple-of-8 divisor of C that is <= cap_c (else full C)."""
    best = 0
    t = 8
    limit = min(C, max(cap_c, 0))
    while t <= limit:
        if C % t == 0:
            best = t
        t += 8
    return best if best > 0 else C


def _make_kernel(hw, inv_hw, sub_c, n_elem_cols, max_num):
    def kernel(x_ref, w1_ref, b1_ref, w2_ref, b2_ref, w3_ref, b3_ref,
               out_ref, acc_ref):
        step = pl.program_id(0)

        @pl.when(step == 0)
        def _init():
            acc_ref[...] = jnp.zeros_like(acc_ref)

        tile_c = x_ref.shape[1]

        # Pool this channel tile over H*W, streaming (B, sub_c, <=128) chunks
        # directly from the ref (no whole-tile materialization -> no vreg
        # spills), and fold each channel sub-group straight into the first
        # Linear layer via a partial matmul against its w1 rows.  The 1/(H*W)
        # mean scale is applied once in the epilogue (linearity).
        upd = None
        for c0 in range(0, tile_c, sub_c):
            c1 = min(c0 + sub_c, tile_c)
            s = None
            for l0 in range(0, hw, LANES):
                l1 = min(l0 + LANES, hw)
                cs = x_ref[:, c0:c1, l0:l1].sum(axis=-1)        # (B, c1-c0)
                s = cs if s is None else s + cs
            part = jnp.dot(s, w1_ref[c0:c1, :],
                           preferred_element_type=jnp.float32)  # (B, hidden)
            upd = part if upd is None else upd + part
        acc_ref[...] = acc_ref[...] + upd

        @pl.when(step == pl.num_programs(0) - 1)
        def _epilogue():
            # Linear(C, 512) bias + ReLU (acc already holds pooled_sum @ w1).
            h1 = jnp.maximum(acc_ref[...] * inv_hw + b1_ref[...], 0.0)
            # Linear(512, c_channels) + ReLU
            h2 = jnp.maximum(
                jnp.dot(h1, w2_ref[...], preferred_element_type=jnp.float32)
                + b2_ref[...], 0.0)
            # Fused final Linear: [element cols | mask cols | zero padding].
            o = jnp.dot(h2, w3_ref[...],
                        preferred_element_type=jnp.float32) + b3_ref[...]
            lane = jax.lax.broadcasted_iota(jnp.int32, o.shape, 1)
            is_mask_col = (lane >= n_elem_cols) & (lane < n_elem_cols + max_num)
            out_ref[...] = jnp.where(is_mask_col, jax.nn.sigmoid(o), o
                                     ).astype(out_ref.dtype)

    return kernel


def mlp_decoder(x, params, *, max_num, element_dim, max_tile_c=None):
    """x: (B, C, H, W) float32 (NCHW, like PyTorch).

    params = (w1, b1, w2, b2, w3, b3), weights stored as (in, out).  Real
    PyTorch nn.Linear weights are (out, in) and must be transposed first.
    Returns (elements (B, max_num, element_dim), mask (B, max_num)).
    """
    B, C, H, W = x.shape
    hw = H * W
    w1, b1, w2, b2, w3, b3 = params
    hidden = w1.shape[1]
    c_code = w2.shape[1]
    out_per = element_dim + 1
    n_elem_cols = max_num * element_dim
    out_cols = n_elem_cols + max_num
    padded_cols = _round_up(out_cols, LANES)

    # ---- parameter plumbing (layout only): split, fuse, lane-pad layer 3 ----
    w3r = w3.reshape(c_code, max_num, out_per)
    b3r = b3.reshape(1, max_num, out_per)
    w3e = w3r[:, :, :element_dim].reshape(c_code, n_elem_cols)
    b3e = b3r[:, :, :element_dim].reshape(1, n_elem_cols)
    w3m = w3r[:, :, element_dim]                      # (c_code, max_num)
    b3m = b3r[:, :, element_dim].reshape(1, max_num)
    col_pad = padded_cols - out_cols
    w3f = jnp.pad(jnp.concatenate([w3e, w3m], axis=1), ((0, 0), (0, col_pad)))
    b3f = jnp.pad(jnp.concatenate([b3e, b3m], axis=1), ((0, 0), (0, col_pad)))

    # ---- flatten spatial dims: metadata reshape only, x is never padded ----
    x_flat = x.reshape(B, C, hw)

    # ---- per-generation VMEM budget -> channel tile size ----
    cap = _vmem_capacity_bytes()
    ceiling = min(cap - 16 * MIB, 96 * MIB)           # scoped-VMEM ceiling per gen
    const_param_bytes = 4 * int(b1.size + w2.size + b2.size + w3f.size + b3f.size)
    out_vmem = _round_up(B, 8) * padded_cols * 4
    acc_vmem = _round_up(B, 8) * hidden * 4
    fixed = 2 * const_param_bytes + 2 * out_vmem + acc_vmem + 2 * MIB
    per_c = 2 * (B * hw + hidden) * 4                 # dbl-buffered x row + w1 row
    budget_c = max(8, (ceiling - fixed) // per_c)

    # Inner-loop shaping: one (B, sub_c, 128) chunk stays well inside the
    # 64-vreg register file; cap the unrolled inner iteration count.
    sub_c = max(8, min(64, (128 // max(B, 1)) // 8 * 8))
    n_lane_chunks = -(-hw // LANES)
    unroll_c = sub_c * max(1, 64 // n_lane_chunks)
    cap_c = min(int(budget_c), int(unroll_c), int(max_tile_c or C))
    tile_c = _pick_tile_c(C, cap_c)
    num_steps = -(-C // tile_c)

    grid_spec = pltpu.PrefetchScalarGridSpec(
        num_scalar_prefetch=0,
        grid=(num_steps,),
        in_specs=[
            pl.BlockSpec((B, tile_c, hw), lambda s: (0, s, 0)),   # pipelined x
            pl.BlockSpec((tile_c, hidden), lambda s: (s, 0)),     # pipelined w1
            pl.BlockSpec(b1.shape, lambda s: (0, 0)),
            pl.BlockSpec(w2.shape, lambda s: (0, 0)),
            pl.BlockSpec(b2.shape, lambda s: (0, 0)),
            pl.BlockSpec(w3f.shape, lambda s: (0, 0)),
            pl.BlockSpec(b3f.shape, lambda s: (0, 0)),
        ],
        out_specs=pl.BlockSpec((B, padded_cols), lambda s: (0, 0)),
        scratch_shapes=[pltpu.VMEM((B, hidden), jnp.float32)],
    )

    need = 2 * (B * tile_c * hw + tile_c * hidden) * 4 + fixed
    vmem_limit = int(max(32 * MIB, min(ceiling, need + 4 * MIB)))

    flops = 2 * B * (C * hidden + hidden * c_code + c_code * padded_cols) + B * C * hw
    bytes_accessed = 4 * int(x_flat.size + w1.size + b1.size + w2.size + b2.size
                             + w3f.size + b3f.size + B * padded_cols)
    cost = pl.CostEstimate(flops=int(flops),
                           transcendentals=int(B * max_num),
                           bytes_accessed=bytes_accessed)

    out = pl.pallas_call(
        _make_kernel(hw, 1.0 / float(hw), sub_c, n_elem_cols, max_num),
        out_shape=jax.ShapeDtypeStruct((B, padded_cols), jnp.float32),
        grid_spec=grid_spec,
        compiler_params=pltpu.CompilerParams(
            dimension_semantics=("arbitrary",),
            vmem_limit_bytes=vmem_limit,
        ),
        cost_estimate=cost,
    )(x_flat, w1, b1, w2, b2, w3f, b3f)

    # Layout-only split/reshape of the single lane-dense output slab.
    x_elements = out[:, :n_elem_cols].reshape(B, max_num, element_dim)
    x_mask = out[:, n_elem_cols:out_cols]
    return x_elements, x_mask


def init_params(key, in_ch, hidden, c_channels, out_size):
    """Deterministic PyTorch-Linear-style init; weights stored as (in, out)."""
    sizes = [(in_ch, hidden), (hidden, c_channels), (c_channels, out_size)]
    params = []
    for fi, fo in sizes:
        key, kw, kb = jax.random.split(key, 3)
        bound = 1.0 / float(jnp.sqrt(jnp.float32(fi)))
        w = jax.random.uniform(kw, (fi, fo), jnp.float32, -bound, bound)
        b = jax.random.uniform(kb, (1, fo), jnp.float32, -bound, bound)
        params += [w, b]
    return params


def reference_forward(x, params, *, max_num, element_dim):
    """Pure-JAX reference matching the PyTorch module semantics."""
    w1, b1, w2, b2, w3, b3 = params
    pooled = jnp.mean(x, axis=(2, 3))                       # avgpool + flatten
    h1 = jnp.maximum(jnp.dot(pooled, w1, precision="highest") + b1, 0.0)
    h2 = jnp.maximum(jnp.dot(h1, w2, precision="highest") + b2, 0.0)
    out = (jnp.dot(h2, w3, precision="highest") + b3
           ).reshape(x.shape[0], max_num, element_dim + 1)
    return out[..., :-1], jax.nn.sigmoid(out[..., -1])


def _check(x, params, *, max_num, element_dim, max_tile_c=None):
    elements, mask = mlp_decoder(x, params, max_num=max_num,
                                 element_dim=element_dim, max_tile_c=max_tile_c)
    jax.block_until_ready((elements, mask))
    ref_elements, ref_mask = reference_forward(
        x, params, max_num=max_num, element_dim=element_dim)
    assert elements.shape == (x.shape[0], max_num, element_dim)
    assert mask.shape == (x.shape[0], max_num)
    # Tolerances allow for TPU matmul-precision differences between the MXU
    # path and the XLA reference; structural errors would be orders larger.
    assert jnp.allclose(elements, ref_elements, atol=2e-3, rtol=2e-3)
    assert jnp.allclose(mask, ref_mask, atol=1e-3, rtol=1e-3)


if __name__ == "__main__":
    # cfg.MODEL.FLOWSETNET.* (synthetic, small)
    ELEMENT_DIM = 4
    MAX_NUM = 8
    C_CHANNELS = 128
    HIDDEN = 512
    B, C, H, W = 2, 64, 16, 16
    OUT_SIZE = (ELEMENT_DIM + 1) * MAX_NUM

    key = jax.random.PRNGKey(0)
    kx, kx2, kp = jax.random.split(key, 3)
    params = init_params(kp, C, HIDDEN, C_CHANNELS, OUT_SIZE)

    # 1) Single-step grid (whole C in one tile).
    x = jax.random.normal(kx, (B, C, H, W), jnp.float32)
    _check(x, params, max_num=MAX_NUM, element_dim=ELEMENT_DIM)

    # 2) Multi-step channel grid: exercises the cross-tile accumulator.
    _check(x, params, max_num=MAX_NUM, element_dim=ELEMENT_DIM, max_tile_c=8)

    # 3) Non-128-multiple spatial extent (no padding needed) + multi-step grid.
    x2 = jax.random.normal(kx2, (B, C, 10, 10), jnp.float32)
    _check(x2, params, max_num=MAX_NUM, element_dim=ELEMENT_DIM, max_tile_c=16)

    print("KERNEL_OK")
</pallas_src>

<mosaic_0001>
module attributes {stable_mosaic.version = 11 : i64} {
  func.func @kernel(%arg0: i32, %arg1: memref<2x64x256xf32, #tpu.memory_space<vmem>>, %arg2: memref<64x512xf32, #tpu.memory_space<vmem>>, %arg3: memref<1x512xf32, #tpu.memory_space<vmem>>, %arg4: memref<512x128xf32, #tpu.memory_space<vmem>>, %arg5: memref<1x128xf32, #tpu.memory_space<vmem>>, %arg6: memref<128x128xf32, #tpu.memory_space<vmem>>, %arg7: memref<1x128xf32, #tpu.memory_space<vmem>>, %arg8: memref<2x128xf32, #tpu.memory_space<vmem>>, %arg9: memref<2x512xf32, #tpu.memory_space<vmem>>) attributes {dimension_semantics = [#tpu.dimension_semantics<arbitrary>], iteration_bounds = array<i64: 1>, scalar_prefetch = 0 : i64, scratch_operands = 1 : i64, tpu.core_type = #tpu.core_type<tc>, window_params = [{transform_indices = @transform_0, window_bounds = array<i64: 2, 64, 256>}, {transform_indices = @transform_1, window_bounds = array<i64: 64, 512>}, {pipeline_mode = #tpu.pipeline_mode<synchronous>, transform_indices = @transform_2, window_bounds = array<i64: 1, 512>}, {pipeline_mode = #tpu.pipeline_mode<synchronous>, transform_indices = @transform_3, window_bounds = array<i64: 512, 128>}, {pipeline_mode = #tpu.pipeline_mode<synchronous>, transform_indices = @transform_4, window_bounds = array<i64: 1, 128>}, {pipeline_mode = #tpu.pipeline_mode<synchronous>, transform_indices = @transform_5, window_bounds = array<i64: 128, 128>}, {pipeline_mode = #tpu.pipeline_mode<synchronous>, transform_indices = @transform_6, window_bounds = array<i64: 1, 128>}, {pipeline_mode = #tpu.pipeline_mode<synchronous>, transform_indices = @transform_7, window_bounds = array<i64: 2, 128>}]} {
    %c0_i32 = arith.constant 0 : i32
    %0 = arith.cmpi eq, %arg0, %c0_i32 : i32
    %1 = arith.extui %0 : i1 to i32
    %c0_i32_0 = arith.constant 0 : i32
    %2 = arith.cmpi ne, %1, %c0_i32_0 : i32
    scf.if %2 {
      %cst_15 = arith.constant 0.000000e+00 : f32
      %16 = vector.broadcast %cst_15 : f32 to vector<2x512xf32>
      %c0_16 = arith.constant 0 : index
      %c0_17 = arith.constant 0 : index
      %17 = vector.load %arg9[%c0_16, %c0_17] : memref<2x512xf32, #tpu.memory_space<vmem>>, vector<2x512xf32>
      tpu.vector_store %arg9[%c0_16, %c0_17], %16 {strides = array<i32>} : memref<2x512xf32, #tpu.memory_space<vmem>>, vector<2x512xf32>,
    } else {
    }
    %c0 = arith.constant 0 : index
    %c0_1 = arith.constant 0 : index
    %c0_2 = arith.constant 0 : index
    %3 = vector.load %arg1[%c0, %c0_1, %c0_2] : memref<2x64x256xf32, #tpu.memory_space<vmem>>, vector<2x64x128xf32>
    %cst = arith.constant dense<0.000000e+00> : vector<2x64xf32>
    %4 = vector.multi_reduction <add>, %3, %cst [2] : vector<2x64x128xf32> to vector<2x64xf32>
    %c0_3 = arith.constant 0 : index
    %c0_4 = arith.constant 0 : index
    %c128 = arith.constant 128 : index
    %5 = vector.load %arg1[%c0_3, %c0_4, %c128] : memref<2x64x256xf32, #tpu.memory_space<vmem>>, vector<2x64x128xf32>
    %cst_5 = arith.constant dense<0.000000e+00> : vector<2x64xf32>
    %6 = vector.multi_reduction <add>, %5, %cst_5 [2] : vector<2x64x128xf32> to vector<2x64xf32>
    %7 = arith.addf %4, %6 : vector<2x64xf32>
    %c0_6 = arith.constant 0 : index
    %c0_7 = arith.constant 0 : index
    %8 = vector.load %arg2[%c0_6, %c0_7] : memref<64x512xf32, #tpu.memory_space<vmem>>, vector<64x512xf32>
    %cst_8 = arith.constant dense<0.000000e+00> : vector<2x512xf32>
    %9 = tpu.matmul %7, %8, %cst_8 {dimension_numbers = #tpu.dot_dimension_numbers<[1], [0], [0], [1], [0, 0, 1, 1], [], []>} : vector<2x64xf32>, vector<64x512xf32>, vector<2x512xf32> -> vector<2x512xf32>
    %c0_9 = arith.constant 0 : index
    %c0_10 = arith.constant 0 : index
    %10 = vector.load %arg9[%c0_9, %c0_10] : memref<2x512xf32, #tpu.memory_space<vmem>>, vector<2x512xf32>
    %11 = arith.addf %10, %9 : vector<2x512xf32>
    %c0_11 = arith.constant 0 : index
    %c0_12 = arith.constant 0 : index
    %12 = vector.load %arg9[%c0_11, %c0_12] : memref<2x512xf32, #tpu.memory_space<vmem>>, vector<2x512xf32>
    tpu.vector_store %arg9[%c0_11, %c0_12], %11 {strides = array<i32>} : memref<2x512xf32, #tpu.memory_space<vmem>>, vector<2x512xf32>,
    %c0_i32_13 = arith.constant 0 : i32
    %13 = arith.cmpi eq, %arg0, %c0_i32_13 : i32
    %14 = arith.extui %13 : i1 to i32
    %c0_i32_14 = arith.constant 0 : i32
    %15 = arith.cmpi ne, %14, %c0_i32_14 : i32
    scf.if %15 {
      %c0_15 = arith.constant 0 : index
      %c0_16 = arith.constant 0 : index
      %16 = vector.load %arg9[%c0_15, %c0_16] : memref<2x512xf32, #tpu.memory_space<vmem>>, vector<2x512xf32>
      %cst_17 = arith.constant 3.906250e-03 : f32
      %17 = vector.broadcast %cst_17 : f32 to vector<2x512xf32>
      %18 = arith.mulf %16, %17 : vector<2x512xf32>
      %c0_18 = arith.constant 0 : index
      %c0_19 = arith.constant 0 : index
      %19 = vector.load %arg3[%c0_18, %c0_19] : memref<1x512xf32, #tpu.memory_space<vmem>>, vector<1x512xf32>
      %20 = vector.broadcast %19 : vector<1x512xf32> to vector<2x512xf32>
      %21 = arith.addf %18, %20 : vector<2x512xf32>
      %cst_20 = arith.constant 0.000000e+00 : f32
      %22 = vector.broadcast %cst_20 : f32 to vector<2x512xf32>
      %23 = arith.maximumf %21, %22 : vector<2x512xf32>
      %c0_21 = arith.constant 0 : index
      %c0_22 = arith.constant 0 : index
      %24 = vector.load %arg4[%c0_21, %c0_22] : memref<512x128xf32, #tpu.memory_space<vmem>>, vector<512x128xf32>
      %cst_23 = arith.constant dense<0.000000e+00> : vector<2x128xf32>
      %25 = tpu.matmul %23, %24, %cst_23 {dimension_numbers = #tpu.dot_dimension_numbers<[1], [0], [0], [1], [0, 0, 1, 1], [], []>} : vector<2x512xf32>, vector<512x128xf32>, vector<2x128xf32> -> vector<2x128xf32>
      %c0_24 = arith.constant 0 : index
      %c0_25 = arith.constant 0 : index
      %26 = vector.load %arg5[%c0_24, %c0_25] : memref<1x128xf32, #tpu.memory_space<vmem>>, vector<1x128xf32>
      %27 = vector.broadcast %26 : vector<1x128xf32> to vector<2x128xf32>
      %28 = arith.addf %25, %27 : vector<2x128xf32>
      %cst_26 = arith.constant 0.000000e+00 : f32
      %29 = vector.broadcast %cst_26 : f32 to vector<2x128xf32>
      %30 = arith.maximumf %28, %29 : vector<2x128xf32>
      %c0_27 = arith.constant 0 : index
      %c0_28 = arith.constant 0 : index
      %31 = vector.load %arg6[%c0_27, %c0_28] : memref<128x128xf32, #tpu.memory_space<vmem>>, vector<128x128xf32>
      %cst_29 = arith.constant dense<0.000000e+00> : vector<2x128xf32>
      %32 = tpu.matmul %30, %31, %cst_29 {dimension_numbers = #tpu.dot_dimension_numbers<[1], [0], [0], [1], [0, 0, 1, 1], [], []>} : vector<2x128xf32>, vector<128x128xf32>, vector<2x128xf32> -> vector<2x128xf32>
      %c0_30 = arith.constant 0 : index
      %c0_31 = arith.constant 0 : index
      %33 = vector.load %arg7[%c0_30, %c0_31] : memref<1x128xf32, #tpu.memory_space<vmem>>, vector<1x128xf32>
      %34 = vector.broadcast %33 : vector<1x128xf32> to vector<2x128xf32>
      %35 = arith.addf %32, %34 : vector<2x128xf32>
      %36 = tpu.iota {dimensions = array<i32: 1>} : vector<2x128xi32>
      %c32_i32 = arith.constant 32 : i32
      %37 = vector.broadcast %c32_i32 : i32 to vector<2x128xi32>
      %38 = arith.cmpi sge, %36, %37 : vector<2x128xi32>
      %c40_i32 = arith.constant 40 : i32
      %39 = vector.broadcast %c40_i32 : i32 to vector<2x128xi32>
      %40 = arith.cmpi slt, %36, %39 : vector<2x128xi32>
      %41 = arith.andi %38, %40 : vector<2x128xi1>
      %42 = arith.negf %35 : vector<2x128xf32>
      %43 = math.exp %42 : vector<2x128xf32>
      %cst_32 = arith.constant 1.000000e+00 : f32
      %44 = vector.broadcast %cst_32 : f32 to vector<2x128xf32>
      %45 = arith.addf %44, %43 : vector<2x128xf32>
      %46 = arith.divf %44, %45 : vector<2x128xf32>
      %47 = arith.select %41, %46, %35 : vector<2x128xi1>, vector<2x128xf32>
      %c0_33 = arith.constant 0 : index
      %c0_34 = arith.constant 0 : index
      %48 = vector.load %arg8[%c0_33, %c0_34] : memref<2x128xf32, #tpu.memory_space<vmem>>, vector<2x128xf32>
      tpu.vector_store %arg8[%c0_33, %c0_34], %47 {strides = array<i32>} : memref<2x128xf32, #tpu.memory_space<vmem>>, vector<2x128xf32>,
    } else {
    }
    return
  }
  func.func @transform_0(%arg0: i32) -> (i32, i32, i32) {
    %c0_i32 = arith.constant 0 : i32
    %c0_i32_0 = arith.constant 0 : i32
    %c0_i32_1 = arith.constant 0 : i32
    return %c0_i32, %arg0, %c0_i32_0 : i32, i32, i32
  }
  func.func @transform_1(%arg0: i32) -> (i32, i32) {
    %c0_i32 = arith.constant 0 : i32
    %c0_i32_0 = arith.constant 0 : i32
    return %arg0, %c0_i32 : i32, i32
  }
  func.func @transform_2(%arg0: i32) -> (i32, i32) {
    %c0_i32 = arith.constant 0 : i32
    %c0_i32_0 = arith.constant 0 : i32
    %c0_i32_1 = arith.constant 0 : i32
    return %c0_i32, %c0_i32_0 : i32, i32
  }
  func.func @transform_3(%arg0: i32) -> (i32, i32) {
    %c0_i32 = arith.constant 0 : i32
    %c0_i32_0 = arith.constant 0 : i32
    %c0_i32_1 = arith.constant 0 : i32
    return %c0_i32, %c0_i32_0 : i32, i32
  }
  func.func @transform_4(%arg0: i32) -> (i32, i32) {
    %c0_i32 = arith.constant 0 : i32
    %c0_i32_0 = arith.constant 0 : i32
    %c0_i32_1 = arith.constant 0 : i32
    return %c0_i32, %c0_i32_0 : i32, i32
  }
  func.func @transform_5(%arg0: i32) -> (i32, i32) {
    %c0_i32 = arith.constant 0 : i32
    %c0_i32_0 = arith.constant 0 : i32
    %c0_i32_1 = arith.constant 0 : i32
    return %c0_i32, %c0_i32_0 : i32, i32
  }
  func.func @transform_6(%arg0: i32) -> (i32, i32) {
    %c0_i32 = arith.constant 0 : i32
    %c0_i32_0 = arith.constant 0 : i32
    %c0_i32_1 = arith.constant 0 : i32
    return %c0_i32, %c0_i32_0 : i32, i32
  }
  func.func @transform_7(%arg0: i32) -> (i32, i32) {
    %c0_i32 = arith.constant 0 : i32
    %c0_i32_0 = arith.constant 0 : i32
    %c0_i32_1 = arith.constant 0 : i32
    return %c0_i32, %c0_i32_0 : i32, i32
  }
}

</mosaic_0001>

<llo_original>
// kernel: tpu_custom_call.1
$region0: #{tpu_custom_call.1}
  #allocation0 [shape = 'u32[]', space=smem, size = 0x4, offset = 0x4, fixed_abs, tag = 'smem constant byte address 0x4 - core index']
  #allocation1 [shape = 'u32[144,128]{1,0:T(1,128)}', space=vmem, size = 0x12000, scoped, tag = 'internal scratch']
  #allocation2 [shape = 'f32[2,512]{1,0:T(2,128)}', space=vmem, size = 0x1000, scoped, tag = 'scratch operand']
  %s0 = inlined_call_operand.hbm [shape: f32[2,64,256], index: 0, kind: input, shape index: {}]
  %s1 = inlined_call_operand.hbm [shape: f32[64,512], index: 1, kind: input, shape index: {}]
  %s2 = inlined_call_operand.hbm [shape: f32[1,512], index: 2, kind: input, shape index: {}]
  %s3 = inlined_call_operand.hbm [shape: f32[512,128], index: 3, kind: input, shape index: {}]
  %s4 = inlined_call_operand.vmem [shape: f32[1,128], index: 4, kind: input, shape index: {}]
  %s5 = inlined_call_operand.hbm [shape: f32[128,128], index: 5, kind: input, shape index: {}]
  %s6 = inlined_call_operand.vmem [shape: f32[1,128], index: 6, kind: input, shape index: {}]
  %s7 = inlined_call_operand.hbm [shape: f32[2,128], index: 7, kind: output, shape index: {}]
  %s8 = sld [smem:[#allocation0]]
  $region66: #{tpu_custom_call.1} parent=0
    _
  %s10 = ssub.s32 1, %s8
  %s11 = scalar_select 0, %s10, %s8
  $region1: #{tpu_custom_call.1} parent=0
    #allocation3 [shape = 'u8[131072]{0}', space=vmem, size = 0x20000, scoped, tag = 'input window, operand 0, single buffered']
    #allocation4 [shape = 's32[1]{0}', space=sflag, size = 0x4, scoped, tag = 'scoped memory for tpu_custom_call.1']
    #allocation5 [shape = 's32[1]{0}', space=sflag, size = 0x4, scoped, tag = 'scoped memory for tpu_custom_call.1']
    #allocation6 [shape = 'u8[131072]{0}', space=vmem, size = 0x20000, scoped, tag = 'input window, operand 1, single buffered']
    #allocation7 [shape = 's32[1]{0}', space=sflag, size = 0x4, scoped, tag = 'scoped memory for tpu_custom_call.1']
    #allocation8 [shape = 'u8[2048]{0}', space=vmem, size = 0x800, scoped, tag = 'input window, operand 2, single buffered']
    #allocation9 [shape = 'u8[262144]{0}', space=vmem, size = 0x40000, scoped, tag = 'input window, operand 3, single buffered']
    #allocation10 [shape = 's32[1]{0}', space=sflag, size = 0x4, scoped, tag = 'scoped memory for tpu_custom_call.1']
    #allocation11 [shape = 'u8[65536]{0}', space=vmem, size = 0x10000, scoped, tag = 'input window, operand 5, single buffered']
    #allocation12 [shape = 'u8[1024]{0}', space=vmem, size = 0x400, scoped, tag = 'output window, operand 0, single buffered']
    %12 = vsyncpa [#allocation4], 0
    %13 = vsyncpa [#allocation7], 0
    %14 = vsyncpa [#allocation10], 0
    %15 = vsyncpa [#allocation5], 0
    // Predicated region
    $region2: #{tpu_custom_call.1} parent=1 // pred_check
      _
    $region3: #{tpu_custom_call.1} parent=1 // pred_check_branch
      %17 = sbr.rel (0) target = $region5
    $region4: #{tpu_custom_call.1} parent=1 // pred_region
      %s19 = ssub.s32 4096, 4096
      %20 = vsyncadd [#allocation4], %s19
      %s21 = sshll.u32 [#allocation3], 4
      %s22 = int_to_ptr.vmem [resolvable:$true] %s21
      %27 = dma.hbm_to_vmem [thread:$0]  %s0, 4096, %s22, [#allocation4], 256, 256, 16
    $region5: #{tpu_custom_call.1} parent=1 // pred_fallthru
      _
    // Predicated region
    $region6: #{tpu_custom_call.1} parent=1 // pred_check
      _
    $region7: #{tpu_custom_call.1} parent=1 // pred_check_branch
      %29 = sbr.rel (0) target = $region9
    $region8: #{tpu_custom_call.1} parent=1 // pred_region
      %s31 = ssub.s32 4096, 4096
      %32 = vsyncadd [#allocation7], %s31
      %s33 = sshll.u32 [#allocation6], 4
      %s34 = int_to_ptr.vmem [resolvable:$true] %s33
      %39 = dma.hbm_to_vmem [thread:$0]  %s1, 4096, %s34, [#allocation7], 512, 512, 32
    $region9: #{tpu_custom_call.1} parent=1 // pred_fallthru
      _
    // Predicated region
    $region10: #{tpu_custom_call.1} parent=1 // pred_check
      _
    $region11: #{tpu_custom_call.1} parent=1 // pred_check_branch
      %41 = sbr.rel (0) target = $region13
    $region12: #{tpu_custom_call.1} parent=1 // pred_region
      %s43 = ssub.s32 64, 64
      %44 = vsyncadd [#allocation7], %s43
      %s46 = sshll.u32 [#allocation8], 4
      %s47 = int_to_ptr.vmem [resolvable:$true] %s46
      %49 = dma.hbm_to_vmem [thread:$0]  %s2, 64, %s47, [#allocation7]
    $region13: #{tpu_custom_call.1} parent=1 // pred_fallthru
      _
    // Predicated region
    $region14: #{tpu_custom_call.1} parent=1 // pred_check
      _
    $region15: #{tpu_custom_call.1} parent=1 // pred_check_branch
      %51 = sbr.rel (0) target = $region17
    $region16: #{tpu_custom_call.1} parent=1 // pred_region
      %s53 = ssub.s32 8192, 8192
      %54 = vsyncadd [#allocation10], %s53
      %s55 = sshll.u32 [#allocation9], 4
      %s56 = int_to_ptr.vmem [resolvable:$true] %s55
      %61 = dma.hbm_to_vmem [thread:$0]  %s3, 8192, %s56, [#allocation10], 128, 128, 8
    $region17: #{tpu_custom_call.1} parent=1 // pred_fallthru
      _
    // Predicated region
    $region18: #{tpu_custom_call.1} parent=1 // pred_check
      _
    $region19: #{tpu_custom_call.1} parent=1 // pred_check_branch
      %63 = sbr.rel (0) target = $region21
    $region20: #{tpu_custom_call.1} parent=1 // pred_region
      _
    $region21: #{tpu_custom_call.1} parent=1 // pred_fallthru
      _
    // Predicated region
    $region22: #{tpu_custom_call.1} parent=1 // pred_check
      _
    $region23: #{tpu_custom_call.1} parent=1 // pred_check_branch
      %65 = sbr.rel (0) target = $region25
    $region24: #{tpu_custom_call.1} parent=1 // pred_region
      %s67 = ssub.s32 2048, 2048
      %68 = vsyncadd [#allocation10], %s67
      %s69 = sshll.u32 [#allocation11], 4
      %s70 = int_to_ptr.vmem [resolvable:$true] %s69
      %75 = dma.hbm_to_vmem [thread:$0]  %s5, 2048, %s70, [#allocation10], 128, 128, 8
    $region25: #{tpu_custom_call.1} parent=1 // pred_fallthru
      _
    // Predicated region
    $region26: #{tpu_custom_call.1} parent=1 // pred_check
      _
    $region27: #{tpu_custom_call.1} parent=1 // pred_check_branch
      %77 = sbr.rel (0) target = $region29
    $region28: #{tpu_custom_call.1} parent=1 // pred_region
      _
    $region29: #{tpu_custom_call.1} parent=1 // pred_fallthru
      _
    // Predicated region
    $region30: #{tpu_custom_call.1} parent=1 // pred_check
      _
    $region31: #{tpu_custom_call.1} parent=1 // pred_check_branch
      %79 = sbr.rel (0) target = $region33
    $region32: #{tpu_custom_call.1} parent=1 // pred_region
      %80 = dma.done [#allocation4], 4096
    $region33: #{tpu_custom_call.1} parent=1 // pred_fallthru
      _
    // Predicated region
    $region34: #{tpu_custom_call.1} parent=1 // pred_check
      _
    $region35: #{tpu_custom_call.1} parent=1 // pred_check_branch
      %82 = sbr.rel (0) target = $region37
    $region36: #{tpu_custom_call.1} parent=1 // pred_region
      %83 = dma.done [#allocation7], 4096
    $region37: #{tpu_custom_call.1} parent=1 // pred_fallthru
      _
    // Predicated region
    $region38: #{tpu_custom_call.1} parent=1 // pred_check
      _
    $region39: #{tpu_custom_call.1} parent=1 // pred_check_branch
      %85 = sbr.rel (0) target = $region41
    $region40: #{tpu_custom_call.1} parent=1 // pred_region
      %86 = dma.done [#allocation7], 64
    $region41: #{tpu_custom_call.1} parent=1 // pred_fallthru
      _
    // Predicated region
    $region42: #{tpu_custom_call.1} parent=1 // pred_check
      _
    $region43: #{tpu_custom_call.1} parent=1 // pred_check_branch
      %88 = sbr.rel (0) target = $region45
    $region44: #{tpu_custom_call.1} parent=1 // pred_region
      %89 = dma.done [#allocation10], 8192
    $region45: #{tpu_custom_call.1} parent=1 // pred_fallthru
      _
    // Predicated region
    $region46: #{tpu_custom_call.1} parent=1 // pred_check
      _
    $region47: #{tpu_custom_call.1} parent=1 // pred_check_branch
      %91 = sbr.rel (0) target = $region49
    $region48: #{tpu_custom_call.1} parent=1 // pred_region
      %92 = dma.done [#allocation10], 2048
    $region49: #{tpu_custom_call.1} parent=1 // pred_fallthru
      _
    %p93 = scmp.eq.s32.totalorder 0, 0
    // Predicated region
    $region50: #{tpu_custom_call.1} parent=1 // pred_check
      %p94 = pneg %p93
    $region51: #{tpu_custom_call.1} parent=1 // pred_check_branch
      %96 = sbr.rel (%p94) target = $region53
    $region52: #{tpu_custom_call.1} parent=1 // pred_region
      %97 = vst [vmem:[#allocation2] sm:$0xff] 0.0
    $region53: #{tpu_custom_call.1} parent=1 // pred_fallthru
      _
    %v98 = vld [vmem:[#allocation3] sm:$0xff]
    %v99 = vld [vmem:[#allocation3 + $0x10] sm:$0xff]
    %v100 = vld [vmem:[#allocation3 + $0x20] sm:$0xff]
    %v101 = vld [vmem:[#allocation3 + $0x30] sm:$0xff]
    %v102 = vld [vmem:[#allocation3 + $0x40] sm:$0xff]
    %v103 = vld [vmem:[#allocation3 + $0x50] sm:$0xff]
    %v104 = vld [vmem:[#allocation3 + $0x60] sm:$0xff]
    %v105 = vld [vmem:[#allocation3 + $0x70] sm:$0xff]
    %v106 = vld [vmem:[#allocation3 + $0x80] sm:$0xff]
    %v107 = vld [vmem:[#allocation3 + $0x90] sm:$0xff]
    %v108 = vld [vmem:[#allocation3 + $0xa0] sm:$0xff]
    %v109 = vld [vmem:[#allocation3 + $0xb0] sm:$0xff]
    %v110 = vld [vmem:[#allocation3 + $0xc0] sm:$0xff]
    %v111 = vld [vmem:[#allocation3 + $0xd0] sm:$0xff]
    %v112 = vld [vmem:[#allocation3 + $0xe0] sm:$0xff]
    %v113 = vld [vmem:[#allocation3 + $0xf0] sm:$0xff]
    %114 = vadd.xlane.f32.xlu0 %v98
    %v115 = vpop.xlane.xlu0 %114
    %116 = vadd.xlane.f32.xlu0 %v99
    %v117 = vpop.xlane.xlu0 %116
    %118 = vadd.xlane.f32.xlu0 %v100
    %v119 = vpop.xlane.xlu0 %118
    %120 = vadd.xlane.f32.xlu0 %v101
    %v121 = vpop.xlane.xlu0 %120
    %122 = vadd.xlane.f32.xlu0 %v102
    %v123 = vpop.xlane.xlu0 %122
    %124 = vadd.xlane.f32.xlu0 %v103
    %v125 = vpop.xlane.xlu0 %124
    %126 = vadd.xlane.f32.xlu0 %v104
    %v127 = vpop.xlane.xlu0 %126
    %128 = vadd.xlane.f32.xlu0 %v105
    %v129 = vpop.xlane.xlu0 %128
    %130 = vadd.xlane.f32.xlu0 %v106
    %v131 = vpop.xlane.xlu0 %130
    %132 = vadd.xlane.f32.xlu0 %v107
    %v133 = vpop.xlane.xlu0 %132
    %134 = vadd.xlane.f32.xlu0 %v108
    %v135 = vpop.xlane.xlu0 %134
    %136 = vadd.xlane.f32.xlu0 %v109
    %v137 = vpop.xlane.xlu0 %136
    %138 = vadd.xlane.f32.xlu0 %v110
    %v139 = vpop.xlane.xlu0 %138
    %140 = vadd.xlane.f32.xlu0 %v111
    %v141 = vpop.xlane.xlu0 %140
    %142 = vadd.xlane.f32.xlu0 %v112
    %v143 = vpop.xlane.xlu0 %142
    %144 = vadd.xlane.f32.xlu0 %v113
    %v145 = vpop.xlane.xlu0 %144
    %v146 = vld [vmem:[#allocation3 + $0x8] sm:$0xff]
    %v147 = vld [vmem:[#allocation3 + $0x18] sm:$0xff]
    %v148 = vld [vmem:[#allocation3 + $0x28] sm:$0xff]
    %v149 = vld [vmem:[#allocation3 + $0x38] sm:$0xff]
    %v150 = vld [vmem:[#allocation3 + $0x48] sm:$0xff]
    %v151 = vld [vmem:[#allocation3 + $0x58] sm:$0xff]
    %v152 = vld [vmem:[#allocation3 + $0x68] sm:$0xff]
    %v153 = vld [vmem:[#allocation3 + $0x78] sm:$0xff]
    %v154 = vld [vmem:[#allocation3 + $0x88] sm:$0xff]
    %v155 = vld [vmem:[#allocation3 + $0x98] sm:$0xff]
    %v156 = vld [vmem:[#allocation3 + $0xa8] sm:$0xff]
    %v157 = vld [vmem:[#allocation3 + $0xb8] sm:$0xff]
    %v158 = vld [vmem:[#allocation3 + $0xc8] sm:$0xff]
    %v159 = vld [vmem:[#allocation3 + $0xd8] sm:$0xff]
    %v160 = vld [vmem:[#allocation3 + $0xe8] sm:$0xff]
    %v161 = vld [vmem:[#allocation3 + $0xf8] sm:$0xff]
    %162 = vadd.xlane.f32.xlu0 %v146
    %v163 = vpop.xlane.xlu0 %162
    %164 = vadd.xlane.f32.xlu0 %v147
    %v165 = vpop.xlane.xlu0 %164
    %166 = vadd.xlane.f32.xlu0 %v148
    %v167 = vpop.xlane.xlu0 %166
    %168 = vadd.xlane.f32.xlu0 %v149
    %v169 = vpop.xlane.xlu0 %168
    %170 = vadd.xlane.f32.xlu0 %v150
    %v171 = vpop.xlane.xlu0 %170
    %172 = vadd.xlane.f32.xlu0 %v151
    %v173 = vpop.xlane.xlu0 %172
    %174 = vadd.xlane.f32.xlu0 %v152
    %v175 = vpop.xlane.xlu0 %174
    %176 = vadd.xlane.f32.xlu0 %v153
    %v177 = vpop.xlane.xlu0 %176
    %178 = vadd.xlane.f32.xlu0 %v154
    %v179 = vpop.xlane.xlu0 %178
    %180 = vadd.xlane.f32.xlu0 %v155
    %v181 = vpop.xlane.xlu0 %180
    %182 = vadd.xlane.f32.xlu0 %v156
    %v183 = vpop.xlane.xlu0 %182
    %184 = vadd.xlane.f32.xlu0 %v157
    %v185 = vpop.xlane.xlu0 %184
    %186 = vadd.xlane.f32.xlu0 %v158
    %v187 = vpop.xlane.xlu0 %186
    %188 = vadd.xlane.f32.xlu0 %v159
    %v189 = vpop.xlane.xlu0 %188
    %190 = vadd.xlane.f32.xlu0 %v160
    %v191 = vpop.xlane.xlu0 %190
    %192 = vadd.xlane.f32.xlu0 %v161
    %v193 = vpop.xlane.xlu0 %192
    %v194 = vadd.f32 %v115, %v163
    %v195 = vadd.f32 %v117, %v165
    %v196 = vadd.f32 %v119, %v167
    %v197 = vadd.f32 %v121, %v169
    %v198 = vadd.f32 %v123, %v171
    %v199 = vadd.f32 %v125, %v173
    %v200 = vadd.f32 %v127, %v175
    %v201 = vadd.f32 %v129, %v177
    %v202 = vadd.f32 %v131, %v179
    %v203 = vadd.f32 %v133, %v181
    %v204 = vadd.f32 %v135, %v183
    %v205 = vadd.f32 %v137, %v185
    %v206 = vadd.f32 %v139, %v187
    %v207 = vadd.f32 %v141, %v189
    %v208 = vadd.f32 %v143, %v191
    %v209 = vadd.f32 %v145, %v193
    %v210 = vld [vmem:[#allocation6] sm:$0xff]
    %v211 = vld [vmem:[#allocation6 + $0x8] sm:$0xff]
    %v212 = vld [vmem:[#allocation6 + $0x10] sm:$0xff]
    %v213 = vld [vmem:[#allocation6 + $0x18] sm:$0xff]
    %v214 = vld [vmem:[#allocation6 + $0x20] sm:$0xff]
    %v215 = vld [vmem:[#allocation6 + $0x28] sm:$0xff]
    %v216 = vld [vmem:[#allocation6 + $0x30] sm:$0xff]
    %v217 = vld [vmem:[#allocation6 + $0x38] sm:$0xff]
    %v218 = vld [vmem:[#allocation6 + $0x40] sm:$0xff]
    %v219 = vld [vmem:[#allocation6 + $0x48] sm:$0xff]
    %v220 = vld [vmem:[#allocation6 + $0x50] sm:$0xff]
    %v221 = vld [vmem:[#allocation6 + $0x58] sm:$0xff]
    %v222 = vld [vmem:[#allocation6 + $0x60] sm:$0xff]
    %v223 = vld [vmem:[#allocation6 + $0x68] sm:$0xff]
    %v224 = vld [vmem:[#allocation6 + $0x70] sm:$0xff]
    %v225 = vld [vmem:[#allocation6 + $0x78] sm:$0xff]
    %v226 = vld [vmem:[#allocation6 + $0x80] sm:$0xff]
    %v227 = vld [vmem:[#allocation6 + $0x88] sm:$0xff]
    %v228 = vld [vmem:[#allocation6 + $0x90] sm:$0xff]
    %v229 = vld [vmem:[#allocation6 + $0x98] sm:$0xff]
    %v230 = vld [vmem:[#allocation6 + $0xa0] sm:$0xff]
    %v231 = vld [vmem:[#allocation6 + $0xa8] sm:$0xff]
    %v232 = vld [vmem:[#allocation6 + $0xb0] sm:$0xff]
    %v233 = vld [vmem:[#allocation6 + $0xb8] sm:$0xff]
    %v234 = vld [vmem:[#allocation6 + $0xc0] sm:$0xff]
    %v235 = vld [vmem:[#allocation6 + $0xc8] sm:$0xff]
    %v236 = vld [vmem:[#allocation6 + $0xd0] sm:$0xff]
    %v237 = vld [vmem:[#allocation6 + $0xd8] sm:$0xff]
    %v238 = vld [vmem:[#allocation6 + $0xe0] sm:$0xff]
    %v239 = vld [vmem:[#allocation6 + $0xe8] sm:$0xff]
    %v240 = vld [vmem:[#allocation6 + $0xf0] sm:$0xff]
    %v241 = vld [vmem:[#allocation6 + $0xf8] sm:$0xff]
    %v258 = vlaneseq
    %v259 = vand.u32 %v258, 127
    %v260 = vlaneseq
    %v261 = vshrl.u32 %v260, 7
    %v262 = vsub.s32 %v259, %v261
    %v263 = vrot.slane %v194, %v262
    %v264 = vadd.s32 %v259, 4294967288
    %v265 = vlaneseq
    %v266 = vshrl.u32 %v265, 7
    %v267 = vsub.s32 %v264, %v266
    %v268 = vrot.slane %v195, %v267
    %vm269 = vcmask 130112
    %v270 = vsel %vm269, %v268, %v263
    %v271 = vadd.s32 %v259, 4294967280
    %v272 = vlaneseq
    %v273 = vshrl.u32 %v272, 7
    %v274 = vsub.s32 %v271, %v273
    %v275 = vrot.slane %v196, %v274
    %vm276 = vcmask 195712
    %v277 = vsel %vm276, %v275, %v270
    %v278 = vadd.s32 %v259, 4294967272
    %v279 = vlaneseq
    %v280 = vshrl.u32 %v279, 7
    %v281 = vsub.s32 %v278, %v280
    %v282 = vrot.slane %v197, %v281
    %vm283 = vcmask 261312
    %v284 = vsel %vm283, %v282, %v277
    %v285 = vadd.s32 %v259, 4294967264
    %v286 = vlaneseq
    %v287 = vshrl.u32 %v286, 7
    %v288 = vsub.s32 %v285, %v287
    %v289 = vrot.slane %v198, %v288
    %vm290 = vcmask 326912
    %v291 = vsel %vm290, %v289, %v284
    %v292 = vadd.s32 %v259, 4294967256
    %v293 = vlaneseq
    %v294 = vshrl.u32 %v293, 7
    %v295 = vsub.s32 %v292, %v294
    %v296 = vrot.slane %v199, %v295
    %vm297 = vcmask 392512
    %v298 = vsel %vm297, %v296, %v291
    %v299 = vadd.s32 %v259, 4294967248
    %v300 = vlaneseq
    %v301 = vshrl.u32 %v300, 7
    %v302 = vsub.s32 %v299, %v301
    %v303 = vrot.slane %v200, %v302
    %vm304 = vcmask 458112
    %v305 = vsel %vm304, %v303, %v298
    %v306 = vadd.s32 %v259, 4294967240
    %v307 = vlaneseq
    %v308 = vshrl.u32 %v307, 7
    %v309 = vsub.s32 %v306, %v308
    %v310 = vrot.slane %v201, %v309
    %vm311 = vcmask 523712
    %v312 = vsel %vm311, %v310, %v305
    %v313 = vlaneseq
    %v314 = vshrl.u32 %v313, 7
    %v315 = vsub.s32 %v259, %v314
    %v316 = vrot.slane %v202, %v315
    %v317 = vlaneseq
    %v318 = vshrl.u32 %v317, 7
    %v319 = vsub.s32 %v264, %v318
    %v320 = vrot.slane %v203, %v319
    %v321 = vsel %vm269, %v320, %v316
    %v322 = vlaneseq
    %v323 = vshrl.u32 %v322, 7
    %v324 = vsub.s32 %v271, %v323
    %v325 = vrot.slane %v204, %v324
    %v326 = vsel %vm276, %v325, %v321
    %v327 = vlaneseq
    %v328 = vshrl.u32 %v327, 7
    %v329 = vsub.s32 %v278, %v328
    %v330 = vrot.slane %v205, %v329
    %v331 = vsel %vm283, %v330, %v326
    %v332 = vlaneseq
    %v333 = vshrl.u32 %v332, 7
    %v334 = vsub.s32 %v285, %v333
    %v335 = vrot.slane %v206, %v334
    %v336 = vsel %vm290, %v335, %v331
    %v337 = vlaneseq
    %v338 = vshrl.u32 %v337, 7
    %v339 = vsub.s32 %v292, %v338
    %v340 = vrot.slane %v207, %v339
    %v341 = vsel %vm297, %v340, %v336
    %v342 = vlaneseq
    %v343 = vshrl.u32 %v342, 7
    %v344 = vsub.s32 %v299, %v343
    %v345 = vrot.slane %v208, %v344
    %v346 = vsel %vm304, %v345, %v341
    %v347 = vlaneseq
    %v348 = vshrl.u32 %v347, 7
    %v349 = vsub.s32 %v306, %v348
    %v350 = vrot.slane %v209, %v349
    %v351 = vsel %vm311, %v350, %v346
    %vm352 = vcmask 1041409
    %v353 = vsel %vm352, %v351, %v312
    %vm354 = vcmask 523264
    %v355 = vsel %vm354, %v353, 0
    %357 = vmatprep.subr.mxu0 0.0
    %358 = vmatpush1.msra.mxu0 0.0
    %359 = vmatprep.subr.mxu0 0.0
    %360 = vmatpush1.msra.mxu0 0.0
    %361 = vmatprep.subr.mxu0 0.0
    %362 = vmatpush1.msra.mxu0 0.0
    %363 = vmatprep.subr.mxu0 0.0
    %364 = vmatpush1.msra.mxu0 0.0
    %365 = vmatprep.subr.mxu0 0.0
    %366 = vmatpush1.msra.mxu0 0.0
    %367 = vmatprep.subr.mxu0 0.0
    %368 = vmatpush1.msra.mxu0 0.0
    %369 = vmatprep.subr.mxu0 0.0
    %370 = vmatpush1.msra.mxu0 0.0
    %371 = vmatprep.subr.mxu0 0.0
    %372 = vmatpush1.msra.mxu0 0.0
    %373 = vmatprep.subr.mxu0 %v239
    %374 = vmatpush1.msra.mxu0 %v238
    %375 = vmatprep.subr.mxu0 %v235
    %376 = vmatpush1.msra.mxu0 %v234
    %377 = vmatprep.subr.mxu0 %v231
    %378 = vmatpush1.msra.mxu0 %v230
    %379 = vmatprep.subr.mxu0 %v227
    %380 = vmatpush1.msra.mxu0 %v226
    %381 = vmatprep.subr.mxu0 %v223
    %382 = vmatpush1.msra.mxu0 %v222
    %383 = vmatprep.subr.mxu0 %v219
    %384 = vmatpush1.msra.mxu0 %v218
    %385 = vmatprep.subr.mxu0 %v215
    %386 = vmatpush1.msra.mxu0 %v214
    %387 = vmatprep.subr.mxu0 %v211
    %388 = vmatpush1.msra.mxu0 %v210
    %389 = vmatprep.subr.mxu0 0.0
    %390 = vmatpush2.msra.mxu0 0.0
    %391 = vmatprep.subr.mxu0 0.0
    %392 = vmatpush2.msra.mxu0 0.0
    %393 = vmatprep.subr.mxu0 0.0
    %394 = vmatpush2.msra.mxu0 0.0
    %395 = vmatprep.subr.mxu0 0.0
    %396 = vmatpush2.msra.mxu0 0.0
    %397 = vmatprep.subr.mxu0 0.0
    %398 = vmatpush2.msra.mxu0 0.0
    %399 = vmatprep.subr.mxu0 0.0
    %400 = vmatpush2.msra.mxu0 0.0
    %401 = vmatprep.subr.mxu0 0.0
    %402 = vmatpush2.msra.mxu0 0.0
    %403 = vmatprep.subr.mxu0 0.0
    %404 = vmatpush2.msra.mxu0 0.0
    %405 = vmatprep.subr.mxu0 0.0
    %406 = vmatpush2.msra.mxu0 0.0
    %407 = vmatprep.subr.mxu0 0.0
    %408 = vmatpush2.msra.mxu0 0.0
    %409 = vmatprep.subr.mxu0 0.0
    %410 = vmatpush2.msra.mxu0 0.0
    %411 = vmatprep.subr.mxu0 0.0
    %412 = vmatpush2.msra.mxu0 0.0
    %413 = vmatprep.subr.mxu0 0.0
    %414 = vmatpush2.msra.mxu0 0.0
    %415 = vmatprep.subr.mxu0 0.0
    %416 = vmatpush2.msra.mxu0 0.0
    %417 = vmatprep.subr.mxu0 0.0
    %418 = vmatpush2.msra.mxu0 0.0
    %419 = vmatprep.subr.mxu0 0.0
    %420 = vmatpush2.msra.mxu0 0.0
    %421 = vmatprep.mubr.f32.mxu0 0.0
    %422 = vmatmul.mubr.f32.gmra.mxu0 %v355
    %v423 = vpop.f32.mrf.mxu0
    %v424 = vadd.f32 0.0, %v423
    %v425 = vpop.f32.mrf.mxu0
    %v426 = vadd.f32 0.0, %v425
    %427 = vdwg.mxu0
    %428 = vmatprep.subr.mxu0 0.0
    %429 = vmatpush1.msra.mxu0 0.0
    %430 = vmatprep.subr.mxu0 0.0
    %431 = vmatpush1.msra.mxu0 0.0
    %432 = vmatprep.subr.mxu0 0.0
    %433 = vmatpush1.msra.mxu0 0.0
    %434 = vmatprep.subr.mxu0 0.0
    %435 = vmatpush1.msra.mxu0 0.0
    %436 = vmatprep.subr.mxu0 0.0
    %437 = vmatpush1.msra.mxu0 0.0
    %438 = vmatprep.subr.mxu0 0.0
    %439 = vmatpush1.msra.mxu0 0.0
    %440 = vmatprep.subr.mxu0 0.0
    %441 = vmatpush1.msra.mxu0 0.0
    %442 = vmatprep.subr.mxu0 0.0
    %443 = vmatpush1.msra.mxu0 0.0
    %444 = vmatprep.subr.mxu0 %v241
    %445 = vmatpush1.msra.mxu0 %v240
    %446 = vmatprep.subr.mxu0 %v237
    %447 = vmatpush1.msra.mxu0 %v236
    %448 = vmatprep.subr.mxu0 %v233
    %449 = vmatpush1.msra.mxu0 %v232
    %450 = vmatprep.subr.mxu0 %v229
    %451 = vmatpush1.msra.mxu0 %v228
    %452 = vmatprep.subr.mxu0 %v225
    %453 = vmatpush1.msra.mxu0 %v224
    %454 = vmatprep.subr.mxu0 %v221
    %455 = vmatpush1.msra.mxu0 %v220
    %456 = vmatprep.subr.mxu0 %v217
    %457 = vmatpush1.msra.mxu0 %v216
    %458 = vmatprep.subr.mxu0 %v213
    %459 = vmatpush1.msra.mxu0 %v212
    %460 = vmatprep.subr.mxu0 0.0
    %461 = vmatpush2.msra.mxu0 0.0
    %462 = vmatprep.subr.mxu0 0.0
    %463 = vmatpush2.msra.mxu0 0.0
    %464 = vmatprep.subr.mxu0 0.0
    %465 = vmatpush2.msra.mxu0 0.0
    %466 = vmatprep.subr.mxu0 0.0
    %467 = vmatpush2.msra.mxu0 0.0
    %468 = vmatprep.subr.mxu0 0.0
    %469 = vmatpush2.msra.mxu0 0.0
    %470 = vmatprep.subr.mxu0 0.0
    %471 = vmatpush2.msra.mxu0 0.0
    %472 = vmatprep.subr.mxu0 0.0
    %473 = vmatpush2.msra.mxu0 0.0
    %474 = vmatprep.subr.mxu0 0.0
    %475 = vmatpush2.msra.mxu0 0.0
    %476 = vmatprep.subr.mxu0 0.0
    %477 = vmatpush2.msra.mxu0 0.0
    %478 = vmatprep.subr.mxu0 0.0
    %479 = vmatpush2.msra.mxu0 0.0
    %480 = vmatprep.subr.mxu0 0.0
    %481 = vmatpush2.msra.mxu0 0.0
    %482 = vmatprep.subr.mxu0 0.0
    %483 = vmatpush2.msra.mxu0 0.0
    %484 = vmatprep.subr.mxu0 0.0
    %485 = vmatpush2.msra.mxu0 0.0
    %486 = vmatprep.subr.mxu0 0.0
    %487 = vmatpush2.msra.mxu0 0.0
    %488 = vmatprep.subr.mxu0 0.0
    %489 = vmatpush2.msra.mxu0 0.0
    %490 = vmatprep.subr.mxu0 0.0
    %491 = vmatpush2.msra.mxu0 0.0
    %492 = vmatprep.mubr.f32.mxu0 0.0
    %493 = vmatmul.mubr.f32.gmra.mxu0 %v355
    %v494 = vpop.f32.mrf.mxu0
    %v495 = vadd.f32 0.0, %v494
    %v496 = vpop.f32.mrf.mxu0
    %v497 = vadd.f32 0.0, %v496
    %498 = vdwg.mxu0
    %v499 = vld [vmem:[#allocation2] sm:$0xff]
    %v504 = vcombine.low %v424, %v426
    %v505 = vcombine.low %v495, %v497
    %v507 = vunpack.c.l.s4 1983009808
    %v508 = vunpack.c.0.s8 %v507
    %v509 = vlaneseq
    %v510 = vshrl.u32 %v509, 7
    %v511 = vsub.s32 %v508, %v510
    %v512 = vrot.slane %v504, %v511
    %v514 = vunpack.c.l.s4 1983009808
    %v515 = vunpack.c.0.s8 %v514
    %v516 = vlaneseq
    %v517 = vshrl.u32 %v516, 7
    %v518 = vsub.s32 %v515, %v517
    %v519 = vrot.slane %v505, %v518
    %v520 = vcombine.low %v512, %v519
    %v522 = vadd.f32 %v499, %v520
    %523 = vst [vmem:[#allocation2] sm:$0xff] %v522
    // Predicated region
    $region54: #{tpu_custom_call.1} parent=1 // pred_check
      %p524 = pneg %p93
    $region55: #{tpu_custom_call.1} parent=1 // pred_check_branch
      %526 = sbr.rel (%p524) target = $region57
    $region56: #{tpu_custom_call.1} parent=1 // pred_region
      %v527 = vld [vmem:[#allocation2] sm:$0xff]
      %v528 = vmul.f32 %v527, 0.00390625
      %v529 = vld [vmem:[#allocation8] sm:$0xf]
      %v531 = vlaneseq
      %v532 = vshrl.u32 %v531, 7
      %v533 = vsub.s32 0, %v532
      %v534 = vrot.slane %v529, %v533
      %v535 = vlaneseq
      %v536 = vshrl.u32 %v535, 7
      %v537 = vsub.s32 1, %v536
      %v538 = vrot.slane %v529, %v537
      %v539 = vlaneseq
      %v540 = vshrl.u32 %v539, 7
      %v541 = vsub.s32 2, %v540
      %v542 = vrot.slane %v529, %v541
      %v543 = vlaneseq
      %v544 = vshrl.u32 %v543, 7
      %v545 = vsub.s32 3, %v544
      %v546 = vrot.slane %v529, %v545
      %v547 = vcombine.low %v534, %v538
      %v548 = vcombine.low %v542, %v546
      %v550 = vunpack.c.l.s4 1983009808
      %v551 = vunpack.c.0.s8 %v550
      %v552 = vlaneseq
      %v553 = vshrl.u32 %v552, 7
      %v554 = vsub.s32 %v551, %v553
      %v555 = vrot.slane %v547, %v554
      %v557 = vunpack.c.l.s4 1983009808
      %v558 = vunpack.c.0.s8 %v557
      %v559 = vlaneseq
      %v560 = vshrl.u32 %v559, 7
      %v561 = vsub.s32 %v558, %v560
      %v562 = vrot.slane %v548, %v561
      %v563 = vcombine.low %v555, %v562
      %v565 = vadd.f32 %v528, %v563
      %v566 = vmax.f32 %v565, 0.0
      %v567 = vld [vmem:[#allocation9] sm:$0xff]
      %v568 = vld [vmem:[#allocation9 + $0x8] sm:$0xff]
      %v569 = vld [vmem:[#allocation9 + $0x10] sm:$0xff]
      %v570 = vld [vmem:[#allocation9 + $0x18] sm:$0xff]
      %v571 = vld [vmem:[#allocation9 + $0x20] sm:$0xff]
      %v572 = vld [vmem:[#allocation9 + $0x28] sm:$0xff]
      %v573 = vld [vmem:[#allocation9 + $0x30] sm:$0xff]
      %v574 = vld [vmem:[#allocation9 + $0x38] sm:$0xff]
      %v575 = vld [vmem:[#allocation9 + $0x40] sm:$0xff]
      %v576 = vld [vmem:[#allocation9 + $0x48] sm:$0xff]
      %v577 = vld [vmem:[#allocation9 + $0x50] sm:$0xff]
      %v578 = vld [vmem:[#allocation9 + $0x58] sm:$0xff]
      %v579 = vld [vmem:[#allocation9 + $0x60] sm:$0xff]
      %v580 = vld [vmem:[#allocation9 + $0x68] sm:$0xff]
      %v581 = vld [vmem:[#allocation9 + $0x70] sm:$0xff]
      %v582 = vld [vmem:[#allocation9 + $0x78] sm:$0xff]
      %v583 = vld [vmem:[#allocation9 + $0x80] sm:$0xff]
      %v584 = vld [vmem:[#allocation9 + $0x88] sm:$0xff]
      %v585 = vld [vmem:[#allocation9 + $0x90] sm:$0xff]
      %v586 = vld [vmem:[#allocation9 + $0x98] sm:$0xff]
      %v587 = vld [vmem:[#allocation9 + $0xa0] sm:$0xff]
      %v588 = vld [vmem:[#allocation9 + $0xa8] sm:$0xff]
      %v589 = vld [vmem:[#allocation9 + $0xb0] sm:$0xff]
      %v590 = vld [vmem:[#allocation9 + $0xb8] sm:$0xff]
      %v591 = vld [vmem:[#allocation9 + $0xc0] sm:$0xff]
      %v592 = vld [vmem:[#allocation9 + $0xc8] sm:$0xff]
      %v593 = vld [vmem:[#allocation9 + $0xd0] sm:$0xff]
      %v594 = vld [vmem:[#allocation9 + $0xd8] sm:$0xff]
      %v595 = vld [vmem:[#allocation9 + $0xe0] sm:$0xff]
      %v596 = vld [vmem:[#allocation9 + $0xe8] sm:$0xff]
      %v597 = vld [vmem:[#allocation9 + $0xf0] sm:$0xff]
      %v598 = vld [vmem:[#allocation9 + $0xf8] sm:$0xff]
      %v599 = vld [vmem:[#allocation9 + $0x100] sm:$0xff]
      %v600 = vld [vmem:[#allocation9 + $0x108] sm:$0xff]
      %v601 = vld [vmem:[#allocation9 + $0x110] sm:$0xff]
      %v602 = vld [vmem:[#allocation9 + $0x118] sm:$0xff]
      %v603 = vld [vmem:[#allocation9 + $0x120] sm:$0xff]
      %v604 = vld [vmem:[#allocation9 + $0x128] sm:$0xff]
      %v605 = vld [vmem:[#allocation9 + $0x130] sm:$0xff]
      %v606 = vld [vmem:[#allocation9 + $0x138] sm:$0xff]
      %v607 = vld [vmem:[#allocation9 + $0x140] sm:$0xff]
      %v608 = vld [vmem:[#allocation9 + $0x148] sm:$0xff]
      %v609 = vld [vmem:[#allocation9 + $0x150] sm:$0xff]
      %v610 = vld [vmem:[#allocation9 + $0x158] sm:$0xff]
      %v611 = vld [vmem:[#allocation9 + $0x160] sm:$0xff]
      %v612 = vld [vmem:[#allocation9 + $0x168] sm:$0xff]
      %v613 = vld [vmem:[#allocation9 + $0x170] sm:$0xff]
      %v614 = vld [vmem:[#allocation9 + $0x178] sm:$0xff]
      %v615 = vld [vmem:[#allocation9 + $0x180] sm:$0xff]
      %v616 = vld [vmem:[#allocation9 + $0x188] sm:$0xff]
      %v617 = vld [vmem:[#allocation9 + $0x190] sm:$0xff]
      %v618 = vld [vmem:[#allocation9 + $0x198] sm:$0xff]
      %v619 = vld [vmem:[#allocation9 + $0x1a0] sm:$0xff]
      %v620 = vld [vmem:[#allocation9 + $0x1a8] sm:$0xff]
      %v621 = vld [vmem:[#allocation9 + $0x1b0] sm:$0xff]
      %v622 = vld [vmem:[#allocation9 + $0x1b8] sm:$0xff]
      %v623 = vld [vmem:[#allocation9 + $0x1c0] sm:$0xff]
      %v624 = vld [vmem:[#allocation9 + $0x1c8] sm:$0xff]
      %v625 = vld [vmem:[#allocation9 + $0x1d0] sm:$0xff]
      %v626 = vld [vmem:[#allocation9 + $0x1d8] sm:$0xff]
      %v627 = vld [vmem:[#allocation9 + $0x1e0] sm:$0xff]
      %v628 = vld [vmem:[#allocation9 + $0x1e8] sm:$0xff]
      %v629 = vld [vmem:[#allocation9 + $0x1f0] sm:$0xff]
      %v630 = vld [vmem:[#allocation9 + $0x1f8] sm:$0xff]
      %v631 = vld [vmem:[%s4] sm:$0x1]
      %v633 = vlaneseq
      %v634 = vshrl.u32 %v633, 7
      %v635 = vsub.s32 0, %v634
      %v636 = vrot.slane %v631, %v635
      %v639 = vcombine.high %v566, %v566
      %v641 = vunpack.c.l.s4 1983009808
      %v642 = vunpack.c.0.s8 %v641
      %v643 = vlaneseq
      %v644 = vshrl.u32 %v643, 7
      %v645 = vsub.s32 %v642, %v644
      %v646 = vrot.slane %v566, %v645
      %v648 = vunpack.c.l.s4 1983009808
      %v649 = vunpack.c.0.s8 %v648
      %v650 = vlaneseq
      %v651 = vshrl.u32 %v650, 7
      %v652 = vsub.s32 %v649, %v651
      %v653 = vrot.slane %v639, %v652
      %v654 = vcombine.high %v646, %v646
      %v655 = vcombine.high %v653, %v653
      %660 = vmatprep.subr.mxu0 0.0
      %661 = vmatpush1.msra.mxu0 %v582
      %662 = vmatprep.subr.mxu0 0.0
      %663 = vmatpush1.msra.mxu0 %v581
      %664 = vmatprep.subr.mxu0 0.0
      %665 = vmatpush1.msra.mxu0 %v580
      %666 = vmatprep.subr.mxu0 0.0
      %667 = vmatpush1.msra.mxu0 %v579
      %668 = vmatprep.subr.mxu0 0.0
      %669 = vmatpush1.msra.mxu0 %v578
      %670 = vmatprep.subr.mxu0 0.0
      %671 = vmatpush1.msra.mxu0 %v577
      %672 = vmatprep.subr.mxu0 0.0
      %673 = vmatpush1.msra.mxu0 %v576
      %674 = vmatprep.subr.mxu0 0.0
      %675 = vmatpush1.msra.mxu0 %v575
      %676 = vmatprep.subr.mxu0 0.0
      %677 = vmatpush1.msra.mxu0 %v574
      %678 = vmatprep.subr.mxu0 0.0
      %679 = vmatpush1.msra.mxu0 %v573
      %680 = vmatprep.subr.mxu0 0.0
      %681 = vmatpush1.msra.mxu0 %v572
      %682 = vmatprep.subr.mxu0 0.0
      %683 = vmatpush1.msra.mxu0 %v571
      %684 = vmatprep.subr.mxu0 0.0
      %685 = vmatpush1.msra.mxu0 %v570
      %686 = vmatprep.subr.mxu0 0.0
      %687 = vmatpush1.msra.mxu0 %v569
      %688 = vmatprep.subr.mxu0 0.0
      %689 = vmatpush1.msra.mxu0 %v568
      %690 = vmatprep.subr.mxu0 0.0
      %691 = vmatpush1.msra.mxu0 %v567
      %692 = vmatprep.subr.mxu0 0.0
      %693 = vmatpush2.msra.mxu0 %v598
      %694 = vmatprep.subr.mxu0 0.0
      %695 = vmatpush2.msra.mxu0 %v597
      %696 = vmatprep.subr.mxu0 0.0
      %697 = vmatpush2.msra.mxu0 %v596
      %698 = vmatprep.subr.mxu0 0.0
      %699 = vmatpush2.msra.mxu0 %v595
      %700 = vmatprep.subr.mxu0 0.0
      %701 = vmatpush2.msra.mxu0 %v594
      %702 = vmatprep.subr.mxu0 0.0
      %703 = vmatpush2.msra.mxu0 %v593
      %704 = vmatprep.subr.mxu0 0.0
      %705 = vmatpush2.msra.mxu0 %v592
      %706 = vmatprep.subr.mxu0 0.0
      %707 = vmatpush2.msra.mxu0 %v591
      %708 = vmatprep.subr.mxu0 0.0
      %709 = vmatpush2.msra.mxu0 %v590
      %710 = vmatprep.subr.mxu0 0.0
      %711 = vmatpush2.msra.mxu0 %v589
      %712 = vmatprep.subr.mxu0 0.0
      %713 = vmatpush2.msra.mxu0 %v588
      %714 = vmatprep.subr.mxu0 0.0
      %715 = vmatpush2.msra.mxu0 %v587
      %716 = vmatprep.subr.mxu0 0.0
      %717 = vmatpush2.msra.mxu0 %v586
      %718 = vmatprep.subr.mxu0 0.0
      %719 = vmatpush2.msra.mxu0 %v585
      %720 = vmatprep.subr.mxu0 0.0
      %721 = vmatpush2.msra.mxu0 %v584
      %722 = vmatprep.subr.mxu0 0.0
      %723 = vmatpush2.msra.mxu0 %v583
      %724 = vmatprep.mubr.f32.mxu0 %v654
      %725 = vmatmul.mubr.f32.gmra.mxu0 %v646
      %v726 = vpop.f32.mrf.mxu0
      %v727 = vadd.f32 %v636, %v726
      %v728 = vpop.f32.mrf.mxu0
      %729 = vdwg.mxu0
      %730 = vmatprep.subr.mxu0 0.0
      %731 = vmatpush1.msra.mxu0 %v614
      %732 = vmatprep.subr.mxu0 0.0
      %733 = vmatpush1.msra.mxu0 %v613
      %734 = vmatprep.subr.mxu0 0.0
      %735 = vmatpush1.msra.mxu0 %v612
      %736 = vmatprep.subr.mxu0 0.0
      %737 = vmatpush1.msra.mxu0 %v611
      %738 = vmatprep.subr.mxu0 0.0
      %739 = vmatpush1.msra.mxu0 %v610
      %740 = vmatprep.subr.mxu0 0.0
      %741 = vmatpush1.msra.mxu0 %v609
      %742 = vmatprep.subr.mxu0 0.0
      %743 = vmatpush1.msra.mxu0 %v608
      %744 = vmatprep.subr.mxu0 0.0
      %745 = vmatpush1.msra.mxu0 %v607
      %746 = vmatprep.subr.mxu0 0.0
      %747 = vmatpush1.msra.mxu0 %v606
      %748 = vmatprep.subr.mxu0 0.0
      %749 = vmatpush1.msra.mxu0 %v605
      %750 = vmatprep.subr.mxu0 0.0
      %751 = vmatpush1.msra.mxu0 %v604
      %752 = vmatprep.subr.mxu0 0.0
      %753 = vmatpush1.msra.mxu0 %v603
      %754 = vmatprep.subr.mxu0 0.0
      %755 = vmatpush1.msra.mxu0 %v602
      %756 = vmatprep.subr.mxu0 0.0
      %757 = vmatpush1.msra.mxu0 %v601
      %758 = vmatprep.subr.mxu0 0.0
      %759 = vmatpush1.msra.mxu0 %v600
      %760 = vmatprep.subr.mxu0 0.0
      %761 = vmatpush1.msra.mxu0 %v599
      %762 = vmatprep.subr.mxu0 0.0
      %763 = vmatpush2.msra.mxu0 %v630
      %764 = vmatprep.subr.mxu0 0.0
      %765 = vmatpush2.msra.mxu0 %v629
      %766 = vmatprep.subr.mxu0 0.0
      %767 = vmatpush2.msra.mxu0 %v628
      %768 = vmatprep.subr.mxu0 0.0
      %769 = vmatpush2.msra.mxu0 %v627
      %770 = vmatprep.subr.mxu0 0.0
      %771 = vmatpush2.msra.mxu0 %v626
      %772 = vmatprep.subr.mxu0 0.0
      %773 = vmatpush2.msra.mxu0 %v625
      %774 = vmatprep.subr.mxu0 0.0
      %775 = vmatpush2.msra.mxu0 %v624
      %776 = vmatprep.subr.mxu0 0.0
      %777 = vmatpush2.msra.mxu0 %v623
      %778 = vmatprep.subr.mxu0 0.0
      %779 = vmatpush2.msra.mxu0 %v622
      %780 = vmatprep.subr.mxu0 0.0
      %781 = vmatpush2.msra.mxu0 %v621
      %782 = vmatprep.subr.mxu0 0.0
      %783 = vmatpush2.msra.mxu0 %v620
      %784 = vmatprep.subr.mxu0 0.0
      %785 = vmatpush2.msra.mxu0 %v619
      %786 = vmatprep.subr.mxu0 0.0
      %787 = vmatpush2.msra.mxu0 %v618
      %788 = vmatprep.subr.mxu0 0.0
      %789 = vmatpush2.msra.mxu0 %v617
      %790 = vmatprep.subr.mxu0 0.0
      %791 = vmatpush2.msra.mxu0 %v616
      %792 = vmatprep.subr.mxu0 0.0
      %793 = vmatpush2.msra.mxu0 %v615
      %794 = vmatprep.mubr.f32.mxu0 %v655
      %795 = vmatmul.mubr.f32.gmra.mxu0 %v653
      %v796 = vpop.f32.mrf.mxu0
      %v797 = vadd.f32 %v727, %v796
      %v798 = vpop.f32.mrf.mxu0
      %799 = vdwg.mxu0
      %v800 = vmax.f32 %v797, 0.0
      %v801 = vld [vmem:[#allocation11] sm:$0xff]
      %v802 = vld [vmem:[#allocation11 + $0x8] sm:$0xff]
      %v803 = vld [vmem:[#allocation11 + $0x10] sm:$0xff]
      %v804 = vld [vmem:[#allocation11 + $0x18] sm:$0xff]
      %v805 = vld [vmem:[#allocation11 + $0x20] sm:$0xff]
      %v806 = vld [vmem:[#allocation11 + $0x28] sm:$0xff]
      %v807 = vld [vmem:[#allocation11 + $0x30] sm:$0xff]
      %v808 = vld [vmem:[#allocation11 + $0x38] sm:$0xff]
      %v809 = vld [vmem:[#allocation11 + $0x40] sm:$0xff]
      %v810 = vld [vmem:[#allocation11 + $0x48] sm:$0xff]
      %v811 = vld [vmem:[#allocation11 + $0x50] sm:$0xff]
      %v812 = vld [vmem:[#allocation11 + $0x58] sm:$0xff]
      %v813 = vld [vmem:[#allocation11 + $0x60] sm:$0xff]
      %v814 = vld [vmem:[#allocation11 + $0x68] sm:$0xff]
      %v815 = vld [vmem:[#allocation11 + $0x70] sm:$0xff]
      %v816 = vld [vmem:[#allocation11 + $0x78] sm:$0xff]
      %v817 = vld [vmem:[%s6] sm:$0x1]
      %v819 = vlaneseq
      %v820 = vshrl.u32 %v819, 7
      %v821 = vsub.s32 0, %v820
      %v822 = vrot.slane %v817, %v821
      %824 = vmatprep.subr.mxu0 0.0
      %825 = vmatpush1.msra.mxu0 %v816
      %826 = vmatprep.subr.mxu0 0.0
      %827 = vmatpush1.msra.mxu0 %v815
      %828 = vmatprep.subr.mxu0 0.0
      %829 = vmatpush1.msra.mxu0 %v814
      %830 = vmatprep.subr.mxu0 0.0
      %831 = vmatpush1.msra.mxu0 %v813
      %832 = vmatprep.subr.mxu0 0.0
      %833 = vmatpush1.msra.mxu0 %v812
      %834 = vmatprep.subr.mxu0 0.0
      %835 = vmatpush1.msra.mxu0 %v811
      %836 = vmatprep.subr.mxu0 0.0
      %837 = vmatpush1.msra.mxu0 %v810
      %838 = vmatprep.subr.mxu0 0.0
      %839 = vmatpush1.msra.mxu0 %v809
      %840 = vmatprep.subr.mxu0 0.0
      %841 = vmatpush1.msra.mxu0 %v808
      %842 = vmatprep.subr.mxu0 0.0
      %843 = vmatpush1.msra.mxu0 %v807
      %844 = vmatprep.subr.mxu0 0.0
      %845 = vmatpush1.msra.mxu0 %v806
      %846 = vmatprep.subr.mxu0 0.0
      %847 = vmatpush1.msra.mxu0 %v805
      %848 = vmatprep.subr.mxu0 0.0
      %849 = vmatpush1.msra.mxu0 %v804
      %850 = vmatprep.subr.mxu0 0.0
      %851 = vmatpush1.msra.mxu0 %v803
      %852 = vmatprep.subr.mxu0 0.0
      %853 = vmatpush1.msra.mxu0 %v802
      %854 = vmatprep.subr.mxu0 0.0
      %855 = vmatpush1.msra.mxu0 %v801
      %856 = vmatprep.subr.mxu0 0.0
      %857 = vmatpush2.msra.mxu0 0.0
      %858 = vmatprep.subr.mxu0 0.0
      %859 = vmatpush2.msra.mxu0 0.0
      %860 = vmatprep.subr.mxu0 0.0
      %861 = vmatpush2.msra.mxu0 0.0
      %862 = vmatprep.subr.mxu0 0.0
      %863 = vmatpush2.msra.mxu0 0.0
      %864 = vmatprep.subr.mxu0 0.0
      %865 = vmatpush2.msra.mxu0 0.0
      %866 = vmatprep.subr.mxu0 0.0
      %867 = vmatpush2.msra.mxu0 0.0
      %868 = vmatprep.subr.mxu0 0.0
      %869 = vmatpush2.msra.mxu0 0.0
      %870 = vmatprep.subr.mxu0 0.0
      %871 = vmatpush2.msra.mxu0 0.0
      %872 = vmatprep.subr.mxu0 0.0
      %873 = vmatpush2.msra.mxu0 0.0
      %874 = vmatprep.subr.mxu0 0.0
      %875 = vmatpush2.msra.mxu0 0.0
      %876 = vmatprep.subr.mxu0 0.0
      %877 = vmatpush2.msra.mxu0 0.0
      %878 = vmatprep.subr.mxu0 0.0
      %879 = vmatpush2.msra.mxu0 0.0
      %880 = vmatprep.subr.mxu0 0.0
      %881 = vmatpush2.msra.mxu0 0.0
      %882 = vmatprep.subr.mxu0 0.0
      %883 = vmatpush2.msra.mxu0 0.0
      %884 = vmatprep.subr.mxu0 0.0
      %885 = vmatpush2.msra.mxu0 0.0
      %886 = vmatprep.subr.mxu0 0.0
      %887 = vmatpush2.msra.mxu0 0.0
      %888 = vmatprep.mubr.f32.mxu0 0.0
      %889 = vmatmul.mubr.f32.gmra.mxu0 %v800
      %v890 = vpop.f32.mrf.mxu0
      %v891 = vadd.f32 %v822, %v890
      %v892 = vpop.f32.mrf.mxu0
      %893 = vdwg.mxu0
      %vm894 = vcmp.ge.s32.totalorder %v259, 32
      %vm895 = vcmp.lt.s32.totalorder %v259, 40
      %vm896 = vmand %vm894, %vm895
      %v897 = vxor.u32 %v891, 2147483648
      %v898 = vmul.f32 %v897, 1.442695
      %v899 = vpow.pop %v898
      %v900 = vadd.f32 %v899, 1.0
      %v901 = vrcp.pop %v900
      %v902 = vmul.f32 1.0, %v901
      %v903 = vsel %vm896, %v902, %v891
      %904 = vst [vmem:[#allocation12] sm:$0x3] %v903
    $region57: #{tpu_custom_call.1} parent=1 // pred_fallthru
      _
    // Predicated region
    $region58: #{tpu_custom_call.1} parent=1 // pred_check
      _
    $region59: #{tpu_custom_call.1} parent=1 // pred_check_branch
      %906 = sbr.rel (0) target = $region61
    $region60: #{tpu_custom_call.1} parent=1 // pred_region
      %s908 = ssub.s32 32, 32
      %909 = vsyncadd [#allocation5], %s908
      %s911 = sshll.u32 [#allocation12], 4
      %s912 = int_to_ptr.vmem [resolvable:$true] %s911
      %914 = dma.vmem_to_hbm [thread:$0]  %s912, 32, %s7, [#allocation5]
    $region61: #{tpu_custom_call.1} parent=1 // pred_fallthru
      _
    // Predicated region
    $region62: #{tpu_custom_call.1} parent=1 // pred_check
      _
    $region63: #{tpu_custom_call.1} parent=1 // pred_check_branch
      %916 = sbr.rel (0) target = $region65
    $region64: #{tpu_custom_call.1} parent=1 // pred_region
      %917 = dma.done [#allocation5], 32
    $region65: #{tpu_custom_call.1} parent=1 // pred_fallthru
      _
    %918 = vsyncpa [#allocation4], 1
    %919 = vsyncpa [#allocation7], 1
    %920 = vsyncpa [#allocation10], 1
    %921 = vsyncpa [#allocation5], 1

</llo_original>
